<compile_context>
chip_gen: v5e
topology: v5e:2x2
jax: 0.10.0
libtpu: 0.0.40
codegen_flags: <defaults>
</compile_context>

<pallas_src>
import functools

import jax
import jax.numpy as jnp
from jax.experimental import pallas as pl
from jax.experimental.pallas import tpu as pltpu


def winenet_kernel(x_ref,
                   w1_ref, b1_ref,
                   w2_ref, b2_ref,
                   w3_ref, b3_ref,
                   w4_ref, b4_ref,
                   o_ref, *, matmul_dtype):
    # Batch-major fused 4-layer MLP: weights are the MXU-stationary RHS, TB rows stream.
    dt = matmul_dtype
    x = x_ref[...].astype(dt)                                                  # (TB, 13)
    h = jnp.dot(x, w1_ref[...].astype(dt),
                preferred_element_type=jnp.float32) + b1_ref[...]              # (TB, 64)
    h = jnp.maximum(h, 0.0)
    h = jnp.dot(h.astype(dt), w2_ref[...].astype(dt),
                preferred_element_type=jnp.float32) + b2_ref[...]              # (TB, 64)
    h = jnp.maximum(h, 0.0)
    h = jnp.dot(h.astype(dt), w3_ref[...].astype(dt),
                preferred_element_type=jnp.float32) + b3_ref[...]              # (TB, 64)
    h = jnp.maximum(h, 0.0)
    out = jnp.dot(h.astype(dt), w4_ref[...].astype(dt),
                  preferred_element_type=jnp.float32) + b4_ref[...]            # (TB, 3)
    o_ref[...] = out.astype(o_ref.dtype)


@functools.partial(jax.jit, static_argnames=("block_b", "matmul_dtype"))
def winenet_forward(x, params, *, block_b=4096, matmul_dtype=jnp.float32):
    """x: (B, 13) float32; params: list of (W (out,in), b (out,)). Returns (B, 3) f32."""
    (w1, b1), (w2, b2), (w3, b3), (w4, b4) = params
    B = x.shape[0]

    def rup(n, m):
        return ((n + m - 1) // m) * m

    # Lane-aligned batch tile, capped at block_b. For B > 256, clamp so the grid has
    # >= 2 steps (lets v7x shard the parallel batch axis over both TensorCores;
    # harmless on single-core v5e/v6e).
    TB = min(block_b, rup(B, 128))
    if B > 256:
        TB = min(TB, rup(pl.cdiv(B, 2), 128))
    Bp = rup(B, TB)
    grid = (Bp // TB,)

    # Pad rows only (no transpose/copy of the whole tensor layout); tail is sliced away.
    xp = x if Bp == B else jnp.pad(x, ((0, Bp - B), (0, 0)))

    # Weights as MXU-stationary RHS (in, out); biases as (1, out) rows broadcasting over batch.
    w1t, w2t, w3t, w4t = w1.T, w2.T, w3.T, w4.T
    b1r, b2r, b3r, b4r = (b.reshape(1, -1) for b in (b1, b2, b3, b4))

    # Resident weights/biases: constant index_map -> DMA'd once, stay in VMEM across the grid.
    const = lambda shape: pl.BlockSpec(shape, lambda i: (0, 0))

    flops = 2 * Bp * (13 * 64 + 64 * 64 + 64 * 64 + 64 * 3)
    weight_bytes = sum(int(a.size) * 4 for p in params for a in p)
    bytes_accessed = Bp * (13 + 3) * 4 + weight_bytes

    out = pl.pallas_call(
        functools.partial(winenet_kernel, matmul_dtype=matmul_dtype),
        out_shape=jax.ShapeDtypeStruct((Bp, 3), jnp.float32),
        grid=grid,
        in_specs=[
            pl.BlockSpec((TB, 13), lambda i: (i, 0)),        # x tile: pipelined over batch
            const(w1t.shape), const(b1r.shape),
            const(w2t.shape), const(b2r.shape),
            const(w3t.shape), const(b3r.shape),
            const(w4t.shape), const(b4r.shape),
        ],
        out_specs=pl.BlockSpec((TB, 3), lambda i: (i, 0)),
        compiler_params=pltpu.CompilerParams(
            dimension_semantics=("parallel",),
            vmem_limit_bytes=48 * 1024 * 1024),
        cost_estimate=pl.CostEstimate(
            flops=flops, transcendentals=0, bytes_accessed=bytes_accessed),
    )(xp, w1t, b1r, w2t, b2r, w3t, b3r, w4t, b4r)

    return out[:B]


def init_params(key):
    """Deterministic init mimicking nn.Linear: uniform(-1/sqrt(fan_in), 1/sqrt(fan_in)).
    Weights kept in PyTorch (out_features, in_features) layout; biases as (out,) vectors."""
    dims = [(13, 64), (64, 64), (64, 64), (64, 3)]
    params = []
    for (fan_in, fan_out) in dims:
        key, kw, kb = jax.random.split(key, 3)
        bound = 1.0 / jnp.sqrt(jnp.float32(fan_in))
        w = jax.random.uniform(kw, (fan_out, fan_in), jnp.float32, -bound, bound)
        b = jax.random.uniform(kb, (fan_out,), jnp.float32, -bound, bound)
        params.append((w, b))
    return params


if __name__ == "__main__":
    key = jax.random.PRNGKey(0)
    key, kx = jax.random.split(key)

    batch = 8
    x = jax.random.normal(kx, (batch, 13), jnp.float32)

    params = init_params(key)

    out = winenet_forward(x, params)
    out = jax.block_until_ready(out)

    # Pure-JAX reference (PyTorch semantics: y = x @ W^T + b).
    def ref_forward(x, params):
        h = x
        for i, (w, b) in enumerate(params):
            h = h @ w.T + b
            if i < len(params) - 1:
                h = jnp.maximum(h, 0.0)
        return h

    ref = ref_forward(x, params)
    assert out.shape == (batch, 3)
    assert jnp.allclose(out, ref, atol=1e-5, rtol=1e-5)

    print("KERNEL_OK")
</pallas_src>

<mosaic_0001>
module attributes {stable_mosaic.version = 11 : i64} {
  func.func @winenet_kernel(%arg0: i32, %arg1: memref<128x13xf32, #tpu.memory_space<vmem>>, %arg2: memref<13x64xf32, #tpu.memory_space<vmem>>, %arg3: memref<1x64xf32, #tpu.memory_space<vmem>>, %arg4: memref<64x64xf32, #tpu.memory_space<vmem>>, %arg5: memref<1x64xf32, #tpu.memory_space<vmem>>, %arg6: memref<64x64xf32, #tpu.memory_space<vmem>>, %arg7: memref<1x64xf32, #tpu.memory_space<vmem>>, %arg8: memref<64x3xf32, #tpu.memory_space<vmem>>, %arg9: memref<1x3xf32, #tpu.memory_space<vmem>>, %arg10: memref<128x3xf32, #tpu.memory_space<vmem>>) attributes {dimension_semantics = [#tpu.dimension_semantics<parallel>], iteration_bounds = array<i64: 1>, scalar_prefetch = 0 : i64, scratch_operands = 0 : i64, tpu.core_type = #tpu.core_type<tc>, window_params = [{transform_indices = @transform_0, window_bounds = array<i64: 128, 13>}, {pipeline_mode = #tpu.pipeline_mode<synchronous>, transform_indices = @transform_1, window_bounds = array<i64: 13, 64>}, {pipeline_mode = #tpu.pipeline_mode<synchronous>, transform_indices = @transform_2, window_bounds = array<i64: 1, 64>}, {pipeline_mode = #tpu.pipeline_mode<synchronous>, transform_indices = @transform_3, window_bounds = array<i64: 64, 64>}, {pipeline_mode = #tpu.pipeline_mode<synchronous>, transform_indices = @transform_4, window_bounds = array<i64: 1, 64>}, {pipeline_mode = #tpu.pipeline_mode<synchronous>, transform_indices = @transform_5, window_bounds = array<i64: 64, 64>}, {pipeline_mode = #tpu.pipeline_mode<synchronous>, transform_indices = @transform_6, window_bounds = array<i64: 1, 64>}, {pipeline_mode = #tpu.pipeline_mode<synchronous>, transform_indices = @transform_7, window_bounds = array<i64: 64, 3>}, {pipeline_mode = #tpu.pipeline_mode<synchronous>, transform_indices = @transform_8, window_bounds = array<i64: 1, 3>}, {transform_indices = @transform_9, window_bounds = array<i64: 128, 3>}]} {
    %c0 = arith.constant 0 : index
    %c0_0 = arith.constant 0 : index
    %0 = vector.load %arg1[%c0, %c0_0] : memref<128x13xf32, #tpu.memory_space<vmem>>, vector<128x13xf32>
    %c0_1 = arith.constant 0 : index
    %c0_2 = arith.constant 0 : index
    %1 = vector.load %arg2[%c0_1, %c0_2] : memref<13x64xf32, #tpu.memory_space<vmem>>, vector<13x64xf32>
    %cst = arith.constant dense<0.000000e+00> : vector<128x64xf32>
    %2 = tpu.matmul %0, %1, %cst {dimension_numbers = #tpu.dot_dimension_numbers<[1], [0], [0], [1], [0, 0, 1, 1], [], []>} : vector<128x13xf32>, vector<13x64xf32>, vector<128x64xf32> -> vector<128x64xf32>
    %c0_3 = arith.constant 0 : index
    %c0_4 = arith.constant 0 : index
    %3 = vector.load %arg3[%c0_3, %c0_4] : memref<1x64xf32, #tpu.memory_space<vmem>>, vector<1x64xf32>
    %4 = vector.broadcast %3 : vector<1x64xf32> to vector<128x64xf32>
    %5 = arith.addf %2, %4 : vector<128x64xf32>
    %cst_5 = arith.constant 0.000000e+00 : f32
    %6 = vector.broadcast %cst_5 : f32 to vector<128x64xf32>
    %7 = arith.maximumf %5, %6 : vector<128x64xf32>
    %c0_6 = arith.constant 0 : index
    %c0_7 = arith.constant 0 : index
    %8 = vector.load %arg4[%c0_6, %c0_7] : memref<64x64xf32, #tpu.memory_space<vmem>>, vector<64x64xf32>
    %cst_8 = arith.constant dense<0.000000e+00> : vector<128x64xf32>
    %9 = tpu.matmul %7, %8, %cst_8 {dimension_numbers = #tpu.dot_dimension_numbers<[1], [0], [0], [1], [0, 0, 1, 1], [], []>} : vector<128x64xf32>, vector<64x64xf32>, vector<128x64xf32> -> vector<128x64xf32>
    %c0_9 = arith.constant 0 : index
    %c0_10 = arith.constant 0 : index
    %10 = vector.load %arg5[%c0_9, %c0_10] : memref<1x64xf32, #tpu.memory_space<vmem>>, vector<1x64xf32>
    %11 = vector.broadcast %10 : vector<1x64xf32> to vector<128x64xf32>
    %12 = arith.addf %9, %11 : vector<128x64xf32>
    %cst_11 = arith.constant 0.000000e+00 : f32
    %13 = vector.broadcast %cst_11 : f32 to vector<128x64xf32>
    %14 = arith.maximumf %12, %13 : vector<128x64xf32>
    %c0_12 = arith.constant 0 : index
    %c0_13 = arith.constant 0 : index
    %15 = vector.load %arg6[%c0_12, %c0_13] : memref<64x64xf32, #tpu.memory_space<vmem>>, vector<64x64xf32>
    %cst_14 = arith.constant dense<0.000000e+00> : vector<128x64xf32>
    %16 = tpu.matmul %14, %15, %cst_14 {dimension_numbers = #tpu.dot_dimension_numbers<[1], [0], [0], [1], [0, 0, 1, 1], [], []>} : vector<128x64xf32>, vector<64x64xf32>, vector<128x64xf32> -> vector<128x64xf32>
    %c0_15 = arith.constant 0 : index
    %c0_16 = arith.constant 0 : index
    %17 = vector.load %arg7[%c0_15, %c0_16] : memref<1x64xf32, #tpu.memory_space<vmem>>, vector<1x64xf32>
    %18 = vector.broadcast %17 : vector<1x64xf32> to vector<128x64xf32>
    %19 = arith.addf %16, %18 : vector<128x64xf32>
    %cst_17 = arith.constant 0.000000e+00 : f32
    %20 = vector.broadcast %cst_17 : f32 to vector<128x64xf32>
    %21 = arith.maximumf %19, %20 : vector<128x64xf32>
    %c0_18 = arith.constant 0 : index
    %c0_19 = arith.constant 0 : index
    %22 = vector.load %arg8[%c0_18, %c0_19] : memref<64x3xf32, #tpu.memory_space<vmem>>, vector<64x3xf32>
    %cst_20 = arith.constant dense<0.000000e+00> : vector<128x3xf32>
    %23 = tpu.matmul %21, %22, %cst_20 {dimension_numbers = #tpu.dot_dimension_numbers<[1], [0], [0], [1], [0, 0, 1, 1], [], []>} : vector<128x64xf32>, vector<64x3xf32>, vector<128x3xf32> -> vector<128x3xf32>
    %c0_21 = arith.constant 0 : index
    %c0_22 = arith.constant 0 : index
    %24 = vector.load %arg9[%c0_21, %c0_22] : memref<1x3xf32, #tpu.memory_space<vmem>>, vector<1x3xf32>
    %25 = vector.broadcast %24 : vector<1x3xf32> to vector<128x3xf32>
    %26 = arith.addf %23, %25 : vector<128x3xf32>
    %c0_23 = arith.constant 0 : index
    %c0_24 = arith.constant 0 : index
    %27 = vector.load %arg10[%c0_23, %c0_24] : memref<128x3xf32, #tpu.memory_space<vmem>>, vector<128x3xf32>
    tpu.vector_store %arg10[%c0_23, %c0_24], %26 {strides = array<i32>} : memref<128x3xf32, #tpu.memory_space<vmem>>, vector<128x3xf32>,
    return
  }
  func.func @transform_0(%arg0: i32) -> (i32, i32) {
    %c0_i32 = arith.constant 0 : i32
    %c0_i32_0 = arith.constant 0 : i32
    return %arg0, %c0_i32 : i32, i32
  }
  func.func @transform_1(%arg0: i32) -> (i32, i32) {
    %c0_i32 = arith.constant 0 : i32
    %c0_i32_0 = arith.constant 0 : i32
    %c0_i32_1 = arith.constant 0 : i32
    return %c0_i32, %c0_i32_0 : i32, i32
  }
  func.func @transform_2(%arg0: i32) -> (i32, i32) {
    %c0_i32 = arith.constant 0 : i32
    %c0_i32_0 = arith.constant 0 : i32
    %c0_i32_1 = arith.constant 0 : i32
    return %c0_i32, %c0_i32_0 : i32, i32
  }
  func.func @transform_3(%arg0: i32) -> (i32, i32) {
    %c0_i32 = arith.constant 0 : i32
    %c0_i32_0 = arith.constant 0 : i32
    %c0_i32_1 = arith.constant 0 : i32
    return %c0_i32, %c0_i32_0 : i32, i32
  }
  func.func @transform_4(%arg0: i32) -> (i32, i32) {
    %c0_i32 = arith.constant 0 : i32
    %c0_i32_0 = arith.constant 0 : i32
    %c0_i32_1 = arith.constant 0 : i32
    return %c0_i32, %c0_i32_0 : i32, i32
  }
  func.func @transform_5(%arg0: i32) -> (i32, i32) {
    %c0_i32 = arith.constant 0 : i32
    %c0_i32_0 = arith.constant 0 : i32
    %c0_i32_1 = arith.constant 0 : i32
    return %c0_i32, %c0_i32_0 : i32, i32
  }
  func.func @transform_6(%arg0: i32) -> (i32, i32) {
    %c0_i32 = arith.constant 0 : i32
    %c0_i32_0 = arith.constant 0 : i32
    %c0_i32_1 = arith.constant 0 : i32
    return %c0_i32, %c0_i32_0 : i32, i32
  }
  func.func @transform_7(%arg0: i32) -> (i32, i32) {
    %c0_i32 = arith.constant 0 : i32
    %c0_i32_0 = arith.constant 0 : i32
    %c0_i32_1 = arith.constant 0 : i32
    return %c0_i32, %c0_i32_0 : i32, i32
  }
  func.func @transform_8(%arg0: i32) -> (i32, i32) {
    %c0_i32 = arith.constant 0 : i32
    %c0_i32_0 = arith.constant 0 : i32
    %c0_i32_1 = arith.constant 0 : i32
    return %c0_i32, %c0_i32_0 : i32, i32
  }
  func.func @transform_9(%arg0: i32) -> (i32, i32) {
    %c0_i32 = arith.constant 0 : i32
    %c0_i32_0 = arith.constant 0 : i32
    return %arg0, %c0_i32 : i32, i32
  }
}

</mosaic_0001>

<llo_original>
// kernel: winenet_forward.1
$region0: #{winenet_forward.1}
  #allocation0 [shape = 'u32[]', space=smem, size = 0x4, offset = 0x4, fixed_abs, tag = 'smem constant byte address 0x4 - core index']
  #allocation1 [shape = 'u32[72,128]{1,0:T(1,128)}', space=vmem, size = 0x9000, scoped, tag = 'internal scratch']
  %s0 = inlined_call_operand.vmem [shape: f32[128,13], index: 0, kind: input, shape index: {}]
  %s1 = inlined_call_operand.vmem [shape: f32[13,64], index: 1, kind: input, shape index: {}]
  %s2 = inlined_call_operand.vmem [shape: f32[1,64], index: 2, kind: input, shape index: {}]
  %s3 = inlined_call_operand.vmem [shape: f32[64,64], index: 3, kind: input, shape index: {}]
  %s4 = inlined_call_operand.vmem [shape: f32[1,64], index: 4, kind: input, shape index: {}]
  %s5 = inlined_call_operand.vmem [shape: f32[64,64], index: 5, kind: input, shape index: {}]
  %s6 = inlined_call_operand.vmem [shape: f32[1,64], index: 6, kind: input, shape index: {}]
  %s7 = inlined_call_operand.vmem [shape: f32[64,3], index: 7, kind: input, shape index: {}]
  %s8 = inlined_call_operand.vmem [shape: f32[1,3], index: 8, kind: input, shape index: {}]
  %s9 = inlined_call_operand.vmem [shape: f32[128,3], index: 9, kind: output, shape index: {}]
  %s10 = sld [smem:[#allocation0]]
  $region46: #{winenet_forward.1} parent=0
    _
  %s12 = ssub.s32 1, %s10
  %s13 = scalar_select 0, %s12, %s10
  // Predicated region
  $region2: #{winenet_forward.1} parent=0 // pred_check
    _
  $region3: #{winenet_forward.1} parent=0 // pred_check_branch
    %15 = sbr.rel (0) target = $region5
  $region4: #{winenet_forward.1} parent=0 // pred_region
    _
  $region5: #{winenet_forward.1} parent=0 // pred_fallthru
    _
  // Predicated region
  $region6: #{winenet_forward.1} parent=0 // pred_check
    _
  $region7: #{winenet_forward.1} parent=0 // pred_check_branch
    %17 = sbr.rel (0) target = $region9
  $region8: #{winenet_forward.1} parent=0 // pred_region
    _
  $region9: #{winenet_forward.1} parent=0 // pred_fallthru
    _
  // Predicated region
  $region10: #{winenet_forward.1} parent=0 // pred_check
    _
  $region11: #{winenet_forward.1} parent=0 // pred_check_branch
    %19 = sbr.rel (0) target = $region13
  $region12: #{winenet_forward.1} parent=0 // pred_region
    _
  $region13: #{winenet_forward.1} parent=0 // pred_fallthru
    _
  // Predicated region
  $region14: #{winenet_forward.1} parent=0 // pred_check
    _
  $region15: #{winenet_forward.1} parent=0 // pred_check_branch
    %21 = sbr.rel (0) target = $region17
  $region16: #{winenet_forward.1} parent=0 // pred_region
    _
  $region17: #{winenet_forward.1} parent=0 // pred_fallthru
    _
  // Predicated region
  $region18: #{winenet_forward.1} parent=0 // pred_check
    _
  $region19: #{winenet_forward.1} parent=0 // pred_check_branch
    %23 = sbr.rel (0) target = $region21
  $region20: #{winenet_forward.1} parent=0 // pred_region
    _
  $region21: #{winenet_forward.1} parent=0 // pred_fallthru
    _
  // Predicated region
  $region22: #{winenet_forward.1} parent=0 // pred_check
    _
  $region23: #{winenet_forward.1} parent=0 // pred_check_branch
    %25 = sbr.rel (0) target = $region25
  $region24: #{winenet_forward.1} parent=0 // pred_region
    _
  $region25: #{winenet_forward.1} parent=0 // pred_fallthru
    _
  // Predicated region
  $region26: #{winenet_forward.1} parent=0 // pred_check
    _
  $region27: #{winenet_forward.1} parent=0 // pred_check_branch
    %27 = sbr.rel (0) target = $region29
  $region28: #{winenet_forward.1} parent=0 // pred_region
    _
  $region29: #{winenet_forward.1} parent=0 // pred_fallthru
    _
  // Predicated region
  $region30: #{winenet_forward.1} parent=0 // pred_check
    _
  $region31: #{winenet_forward.1} parent=0 // pred_check_branch
    %29 = sbr.rel (0) target = $region33
  $region32: #{winenet_forward.1} parent=0 // pred_region
    _
  $region33: #{winenet_forward.1} parent=0 // pred_fallthru
    _
  // Predicated region
  $region34: #{winenet_forward.1} parent=0 // pred_check
    _
  $region35: #{winenet_forward.1} parent=0 // pred_check_branch
    %31 = sbr.rel (0) target = $region37
  $region36: #{winenet_forward.1} parent=0 // pred_region
    _
  $region37: #{winenet_forward.1} parent=0 // pred_fallthru
    _
  %v32 = vld [vmem:[%s0] sm:$0xff]
  %v33 = vld [vmem:[%s0 + $0x8] sm:$0xff]
  %v34 = vld [vmem:[%s0 + $0x10] sm:$0xff]
  %v35 = vld [vmem:[%s0 + $0x18] sm:$0xff]
  %v36 = vld [vmem:[%s0 + $0x20] sm:$0xff]
  %v37 = vld [vmem:[%s0 + $0x28] sm:$0xff]
  %v38 = vld [vmem:[%s0 + $0x30] sm:$0xff]
  %v39 = vld [vmem:[%s0 + $0x38] sm:$0xff]
  %v40 = vld [vmem:[%s0 + $0x40] sm:$0xff]
  %v41 = vld [vmem:[%s0 + $0x48] sm:$0xff]
  %v42 = vld [vmem:[%s0 + $0x50] sm:$0xff]
  %v43 = vld [vmem:[%s0 + $0x58] sm:$0xff]
  %v44 = vld [vmem:[%s0 + $0x60] sm:$0xff]
  %v45 = vld [vmem:[%s0 + $0x68] sm:$0xff]
  %v46 = vld [vmem:[%s0 + $0x70] sm:$0xff]
  %v47 = vld [vmem:[%s0 + $0x78] sm:$0xff]
  %v48 = vld [vmem:[%s1] sm:$0xff]
  %v49 = vld [vmem:[%s1 + $0x8] sm:$0x1f]
  %v50 = vld [vmem:[%s2] sm:$0x1]
  %v52 = vperm.slane %v50, 0
  %vm54 = vcmask 105472
  %v56 = vsel %vm54, %v32, 0
  %v59 = vsel %vm54, %v33, 0
  %v62 = vsel %vm54, %v34, 0
  %v65 = vsel %vm54, %v35, 0
  %v68 = vsel %vm54, %v36, 0
  %v71 = vsel %vm54, %v37, 0
  %v74 = vsel %vm54, %v38, 0
  %v77 = vsel %vm54, %v39, 0
  %v80 = vsel %vm54, %v40, 0
  %v83 = vsel %vm54, %v41, 0
  %v86 = vsel %vm54, %v42, 0
  %v89 = vsel %vm54, %v43, 0
  %v92 = vsel %vm54, %v44, 0
  %v95 = vsel %vm54, %v45, 0
  %v98 = vsel %vm54, %v46, 0
  %v101 = vsel %vm54, %v47, 0
  %vm103 = vcmask 1044480
  %v105 = vsel %vm103, %v49, 0
  %107 = vmatpush.msra.mxu0 0.0
  %108 = vmatpush.msra.mxu0 0.0
  %109 = vmatpush.msra.mxu0 0.0
  %110 = vmatpush.msra.mxu0 0.0
  %111 = vmatpush.msra.mxu0 0.0
  %112 = vmatpush.msra.mxu0 0.0
  %113 = vmatpush.msra.mxu0 0.0
  %114 = vmatpush.msra.mxu0 0.0
  %115 = vmatpush.msra.mxu0 0.0
  %116 = vmatpush.msra.mxu0 0.0
  %117 = vmatpush.msra.mxu0 0.0
  %118 = vmatpush.msra.mxu0 0.0
  %119 = vmatpush.msra.mxu0 0.0
  %120 = vmatpush.msra.mxu0 0.0
  %121 = vmatpush.msra.mxu0 %v105
  %122 = vmatpush.msra.mxu0 %v48
  %123 = vmatmul.f32.gmra.mxu0 %v56
  %v124 = vpop.f32.mrf.mxu0
  %v125 = vadd.f32 %v52, %v124
  %126 = vmatmul.f32.gmra.mxu0 %v59
  %v127 = vpop.f32.mrf.mxu0
  %v128 = vadd.f32 %v52, %v127
  %129 = vmatmul.f32.gmra.mxu0 %v62
  %v130 = vpop.f32.mrf.mxu0
  %v131 = vadd.f32 %v52, %v130
  %132 = vmatmul.f32.gmra.mxu0 %v65
  %v133 = vpop.f32.mrf.mxu0
  %v134 = vadd.f32 %v52, %v133
  %135 = vmatmul.f32.gmra.mxu0 %v68
  %v136 = vpop.f32.mrf.mxu0
  %v137 = vadd.f32 %v52, %v136
  %138 = vmatmul.f32.gmra.mxu0 %v71
  %v139 = vpop.f32.mrf.mxu0
  %v140 = vadd.f32 %v52, %v139
  %141 = vmatmul.f32.gmra.mxu0 %v74
  %v142 = vpop.f32.mrf.mxu0
  %v143 = vadd.f32 %v52, %v142
  %144 = vmatmul.f32.gmra.mxu0 %v77
  %v145 = vpop.f32.mrf.mxu0
  %v146 = vadd.f32 %v52, %v145
  %147 = vmatmul.f32.gmra.mxu0 %v80
  %v148 = vpop.f32.mrf.mxu0
  %v149 = vadd.f32 %v52, %v148
  %150 = vmatmul.f32.gmra.mxu0 %v83
  %v151 = vpop.f32.mrf.mxu0
  %v152 = vadd.f32 %v52, %v151
  %153 = vmatmul.f32.gmra.mxu0 %v86
  %v154 = vpop.f32.mrf.mxu0
  %v155 = vadd.f32 %v52, %v154
  %156 = vmatmul.f32.gmra.mxu0 %v89
  %v157 = vpop.f32.mrf.mxu0
  %v158 = vadd.f32 %v52, %v157
  %159 = vmatmul.f32.gmra.mxu0 %v92
  %v160 = vpop.f32.mrf.mxu0
  %v161 = vadd.f32 %v52, %v160
  %162 = vmatmul.f32.gmra.mxu0 %v95
  %v163 = vpop.f32.mrf.mxu0
  %v164 = vadd.f32 %v52, %v163
  %165 = vmatmul.f32.gmra.mxu0 %v98
  %v166 = vpop.f32.mrf.mxu0
  %v167 = vadd.f32 %v52, %v166
  %168 = vmatmul.f32.gmra.mxu0 %v101
  %v169 = vpop.f32.mrf.mxu0
  %v170 = vadd.f32 %v52, %v169
  %171 = vdwg.mxu0
  %v172 = vmax.f32 %v125, 0.0
  %v173 = vmax.f32 %v128, 0.0
  %v174 = vmax.f32 %v131, 0.0
  %v175 = vmax.f32 %v134, 0.0
  %v176 = vmax.f32 %v137, 0.0
  %v177 = vmax.f32 %v140, 0.0
  %v178 = vmax.f32 %v143, 0.0
  %v179 = vmax.f32 %v146, 0.0
  %v180 = vmax.f32 %v149, 0.0
  %v181 = vmax.f32 %v152, 0.0
  %v182 = vmax.f32 %v155, 0.0
  %v183 = vmax.f32 %v158, 0.0
  %v184 = vmax.f32 %v161, 0.0
  %v185 = vmax.f32 %v164, 0.0
  %v186 = vmax.f32 %v167, 0.0
  %v187 = vmax.f32 %v170, 0.0
  %v188 = vld [vmem:[%s3] sm:$0xff]
  %v189 = vld [vmem:[%s3 + $0x8] sm:$0xff]
  %v190 = vld [vmem:[%s3 + $0x10] sm:$0xff]
  %v191 = vld [vmem:[%s3 + $0x18] sm:$0xff]
  %v192 = vld [vmem:[%s3 + $0x20] sm:$0xff]
  %v193 = vld [vmem:[%s3 + $0x28] sm:$0xff]
  %v194 = vld [vmem:[%s3 + $0x30] sm:$0xff]
  %v195 = vld [vmem:[%s3 + $0x38] sm:$0xff]
  %v196 = vld [vmem:[%s4] sm:$0x1]
  %v198 = vperm.slane %v196, 0
  %vm200 = vcmask 523264
  %v202 = vsel %vm200, %v172, 0
  %v205 = vsel %vm200, %v173, 0
  %v208 = vsel %vm200, %v174, 0
  %v211 = vsel %vm200, %v175, 0
  %v214 = vsel %vm200, %v176, 0
  %v217 = vsel %vm200, %v177, 0
  %v220 = vsel %vm200, %v178, 0
  %v223 = vsel %vm200, %v179, 0
  %v226 = vsel %vm200, %v180, 0
  %v229 = vsel %vm200, %v181, 0
  %v232 = vsel %vm200, %v182, 0
  %v235 = vsel %vm200, %v183, 0
  %v238 = vsel %vm200, %v184, 0
  %v241 = vsel %vm200, %v185, 0
  %v244 = vsel %vm200, %v186, 0
  %v247 = vsel %vm200, %v187, 0
  %249 = vmatpush.msra.mxu0 0.0
  %250 = vmatpush.msra.mxu0 0.0
  %251 = vmatpush.msra.mxu0 0.0
  %252 = vmatpush.msra.mxu0 0.0
  %253 = vmatpush.msra.mxu0 0.0
  %254 = vmatpush.msra.mxu0 0.0
  %255 = vmatpush.msra.mxu0 0.0
  %256 = vmatpush.msra.mxu0 0.0
  %257 = vmatpush.msra.mxu0 %v195
  %258 = vmatpush.msra.mxu0 %v194
  %259 = vmatpush.msra.mxu0 %v193
  %260 = vmatpush.msra.mxu0 %v192
  %261 = vmatpush.msra.mxu0 %v191
  %262 = vmatpush.msra.mxu0 %v190
  %263 = vmatpush.msra.mxu0 %v189
  %264 = vmatpush.msra.mxu0 %v188
  %265 = vmatmul.f32.gmra.mxu0 %v202
  %v266 = vpop.f32.mrf.mxu0
  %v267 = vadd.f32 %v198, %v266
  %268 = vmatmul.f32.gmra.mxu0 %v205
  %v269 = vpop.f32.mrf.mxu0
  %v270 = vadd.f32 %v198, %v269
  %271 = vmatmul.f32.gmra.mxu0 %v208
  %v272 = vpop.f32.mrf.mxu0
  %v273 = vadd.f32 %v198, %v272
  %274 = vmatmul.f32.gmra.mxu0 %v211
  %v275 = vpop.f32.mrf.mxu0
  %v276 = vadd.f32 %v198, %v275
  %277 = vmatmul.f32.gmra.mxu0 %v214
  %v278 = vpop.f32.mrf.mxu0
  %v279 = vadd.f32 %v198, %v278
  %280 = vmatmul.f32.gmra.mxu0 %v217
  %v281 = vpop.f32.mrf.mxu0
  %v282 = vadd.f32 %v198, %v281
  %283 = vmatmul.f32.gmra.mxu0 %v220
  %v284 = vpop.f32.mrf.mxu0
  %v285 = vadd.f32 %v198, %v284
  %286 = vmatmul.f32.gmra.mxu0 %v223
  %v287 = vpop.f32.mrf.mxu0
  %v288 = vadd.f32 %v198, %v287
  %289 = vmatmul.f32.gmra.mxu0 %v226
  %v290 = vpop.f32.mrf.mxu0
  %v291 = vadd.f32 %v198, %v290
  %292 = vmatmul.f32.gmra.mxu0 %v229
  %v293 = vpop.f32.mrf.mxu0
  %v294 = vadd.f32 %v198, %v293
  %295 = vmatmul.f32.gmra.mxu0 %v232
  %v296 = vpop.f32.mrf.mxu0
  %v297 = vadd.f32 %v198, %v296
  %298 = vmatmul.f32.gmra.mxu0 %v235
  %v299 = vpop.f32.mrf.mxu0
  %v300 = vadd.f32 %v198, %v299
  %301 = vmatmul.f32.gmra.mxu0 %v238
  %v302 = vpop.f32.mrf.mxu0
  %v303 = vadd.f32 %v198, %v302
  %304 = vmatmul.f32.gmra.mxu0 %v241
  %v305 = vpop.f32.mrf.mxu0
  %v306 = vadd.f32 %v198, %v305
  %307 = vmatmul.f32.gmra.mxu0 %v244
  %v308 = vpop.f32.mrf.mxu0
  %v309 = vadd.f32 %v198, %v308
  %310 = vmatmul.f32.gmra.mxu0 %v247
  %v311 = vpop.f32.mrf.mxu0
  %v312 = vadd.f32 %v198, %v311
  %313 = vdwg.mxu0
  %v314 = vmax.f32 %v267, 0.0
  %v315 = vmax.f32 %v270, 0.0
  %v316 = vmax.f32 %v273, 0.0
  %v317 = vmax.f32 %v276, 0.0
  %v318 = vmax.f32 %v279, 0.0
  %v319 = vmax.f32 %v282, 0.0
  %v320 = vmax.f32 %v285, 0.0
  %v321 = vmax.f32 %v288, 0.0
  %v322 = vmax.f32 %v291, 0.0
  %v323 = vmax.f32 %v294, 0.0
  %v324 = vmax.f32 %v297, 0.0
  %v325 = vmax.f32 %v300, 0.0
  %v326 = vmax.f32 %v303, 0.0
  %v327 = vmax.f32 %v306, 0.0
  %v328 = vmax.f32 %v309, 0.0
  %v329 = vmax.f32 %v312, 0.0
  %v330 = vld [vmem:[%s5] sm:$0xff]
  %v331 = vld [vmem:[%s5 + $0x8] sm:$0xff]
  %v332 = vld [vmem:[%s5 + $0x10] sm:$0xff]
  %v333 = vld [vmem:[%s5 + $0x18] sm:$0xff]
  %v334 = vld [vmem:[%s5 + $0x20] sm:$0xff]
  %v335 = vld [vmem:[%s5 + $0x28] sm:$0xff]
  %v336 = vld [vmem:[%s5 + $0x30] sm:$0xff]
  %v337 = vld [vmem:[%s5 + $0x38] sm:$0xff]
  %v338 = vld [vmem:[%s6] sm:$0x1]
  %v340 = vperm.slane %v338, 0
  %v343 = vsel %vm200, %v314, 0
  %v346 = vsel %vm200, %v315, 0
  %v349 = vsel %vm200, %v316, 0
  %v352 = vsel %vm200, %v317, 0
  %v355 = vsel %vm200, %v318, 0
  %v358 = vsel %vm200, %v319, 0
  %v361 = vsel %vm200, %v320, 0
  %v364 = vsel %vm200, %v321, 0
  %v367 = vsel %vm200, %v322, 0
  %v370 = vsel %vm200, %v323, 0
  %v373 = vsel %vm200, %v324, 0
  %v376 = vsel %vm200, %v325, 0
  %v379 = vsel %vm200, %v326, 0
  %v382 = vsel %vm200, %v327, 0
  %v385 = vsel %vm200, %v328, 0
  %v388 = vsel %vm200, %v329, 0
  %390 = vmatpush.msra.mxu0 0.0
  %391 = vmatpush.msra.mxu0 0.0
  %392 = vmatpush.msra.mxu0 0.0
  %393 = vmatpush.msra.mxu0 0.0
  %394 = vmatpush.msra.mxu0 0.0
  %395 = vmatpush.msra.mxu0 0.0
  %396 = vmatpush.msra.mxu0 0.0
  %397 = vmatpush.msra.mxu0 0.0
  %398 = vmatpush.msra.mxu0 %v337
  %399 = vmatpush.msra.mxu0 %v336
  %400 = vmatpush.msra.mxu0 %v335
  %401 = vmatpush.msra.mxu0 %v334
  %402 = vmatpush.msra.mxu0 %v333
  %403 = vmatpush.msra.mxu0 %v332
  %404 = vmatpush.msra.mxu0 %v331
  %405 = vmatpush.msra.mxu0 %v330
  %406 = vmatmul.f32.gmra.mxu0 %v343
  %v407 = vpop.f32.mrf.mxu0
  %v408 = vadd.f32 %v340, %v407
  %409 = vmatmul.f32.gmra.mxu0 %v346
  %v410 = vpop.f32.mrf.mxu0
  %v411 = vadd.f32 %v340, %v410
  %412 = vmatmul.f32.gmra.mxu0 %v349
  %v413 = vpop.f32.mrf.mxu0
  %v414 = vadd.f32 %v340, %v413
  %415 = vmatmul.f32.gmra.mxu0 %v352
  %v416 = vpop.f32.mrf.mxu0
  %v417 = vadd.f32 %v340, %v416
  %418 = vmatmul.f32.gmra.mxu0 %v355
  %v419 = vpop.f32.mrf.mxu0
  %v420 = vadd.f32 %v340, %v419
  %421 = vmatmul.f32.gmra.mxu0 %v358
  %v422 = vpop.f32.mrf.mxu0
  %v423 = vadd.f32 %v340, %v422
  %424 = vmatmul.f32.gmra.mxu0 %v361
  %v425 = vpop.f32.mrf.mxu0
  %v426 = vadd.f32 %v340, %v425
  %427 = vmatmul.f32.gmra.mxu0 %v364
  %v428 = vpop.f32.mrf.mxu0
  %v429 = vadd.f32 %v340, %v428
  %430 = vmatmul.f32.gmra.mxu0 %v367
  %v431 = vpop.f32.mrf.mxu0
  %v432 = vadd.f32 %v340, %v431
  %433 = vmatmul.f32.gmra.mxu0 %v370
  %v434 = vpop.f32.mrf.mxu0
  %v435 = vadd.f32 %v340, %v434
  %436 = vmatmul.f32.gmra.mxu0 %v373
  %v437 = vpop.f32.mrf.mxu0
  %v438 = vadd.f32 %v340, %v437
  %439 = vmatmul.f32.gmra.mxu0 %v376
  %v440 = vpop.f32.mrf.mxu0
  %v441 = vadd.f32 %v340, %v440
  %442 = vmatmul.f32.gmra.mxu0 %v379
  %v443 = vpop.f32.mrf.mxu0
  %v444 = vadd.f32 %v340, %v443
  %445 = vmatmul.f32.gmra.mxu0 %v382
  %v446 = vpop.f32.mrf.mxu0
  %v447 = vadd.f32 %v340, %v446
  %448 = vmatmul.f32.gmra.mxu0 %v385
  %v449 = vpop.f32.mrf.mxu0
  %v450 = vadd.f32 %v340, %v449
  %451 = vmatmul.f32.gmra.mxu0 %v388
  %v452 = vpop.f32.mrf.mxu0
  %v453 = vadd.f32 %v340, %v452
  %454 = vdwg.mxu0
  %v455 = vmax.f32 %v408, 0.0
  %v456 = vmax.f32 %v411, 0.0
  %v457 = vmax.f32 %v414, 0.0
  %v458 = vmax.f32 %v417, 0.0
  %v459 = vmax.f32 %v420, 0.0
  %v460 = vmax.f32 %v423, 0.0
  %v461 = vmax.f32 %v426, 0.0
  %v462 = vmax.f32 %v429, 0.0
  %v463 = vmax.f32 %v432, 0.0
  %v464 = vmax.f32 %v435, 0.0
  %v465 = vmax.f32 %v438, 0.0
  %v466 = vmax.f32 %v441, 0.0
  %v467 = vmax.f32 %v444, 0.0
  %v468 = vmax.f32 %v447, 0.0
  %v469 = vmax.f32 %v450, 0.0
  %v470 = vmax.f32 %v453, 0.0
  %v471 = vld [vmem:[%s7] sm:$0xff]
  %v472 = vld [vmem:[%s7 + $0x8] sm:$0xff]
  %v473 = vld [vmem:[%s7 + $0x10] sm:$0xff]
  %v474 = vld [vmem:[%s7 + $0x18] sm:$0xff]
  %v475 = vld [vmem:[%s7 + $0x20] sm:$0xff]
  %v476 = vld [vmem:[%s7 + $0x28] sm:$0xff]
  %v477 = vld [vmem:[%s7 + $0x30] sm:$0xff]
  %v478 = vld [vmem:[%s7 + $0x38] sm:$0xff]
  %v479 = vld [vmem:[%s8] sm:$0x1]
  %v481 = vperm.slane %v479, 0
  %v484 = vsel %vm200, %v455, 0
  %v487 = vsel %vm200, %v456, 0
  %v490 = vsel %vm200, %v457, 0
  %v493 = vsel %vm200, %v458, 0
  %v496 = vsel %vm200, %v459, 0
  %v499 = vsel %vm200, %v460, 0
  %v502 = vsel %vm200, %v461, 0
  %v505 = vsel %vm200, %v462, 0
  %v508 = vsel %vm200, %v463, 0
  %v511 = vsel %vm200, %v464, 0
  %v514 = vsel %vm200, %v465, 0
  %v517 = vsel %vm200, %v466, 0
  %v520 = vsel %vm200, %v467, 0
  %v523 = vsel %vm200, %v468, 0
  %v526 = vsel %vm200, %v469, 0
  %v529 = vsel %vm200, %v470, 0
  %531 = vmatpush.msra.mxu0 0.0
  %532 = vmatpush.msra.mxu0 0.0
  %533 = vmatpush.msra.mxu0 0.0
  %534 = vmatpush.msra.mxu0 0.0
  %535 = vmatpush.msra.mxu0 0.0
  %536 = vmatpush.msra.mxu0 0.0
  %537 = vmatpush.msra.mxu0 0.0
  %538 = vmatpush.msra.mxu0 0.0
  %539 = vmatpush.msra.mxu0 %v478
  %540 = vmatpush.msra.mxu0 %v477
  %541 = vmatpush.msra.mxu0 %v476
  %542 = vmatpush.msra.mxu0 %v475
  %543 = vmatpush.msra.mxu0 %v474
  %544 = vmatpush.msra.mxu0 %v473
  %545 = vmatpush.msra.mxu0 %v472
  %546 = vmatpush.msra.mxu0 %v471
  %547 = vmatmul.f32.gmra.mxu0 %v484
  %v548 = vpop.f32.mrf.mxu0
  %v549 = vadd.f32 %v481, %v548
  %550 = vmatmul.f32.gmra.mxu0 %v487
  %v551 = vpop.f32.mrf.mxu0
  %v552 = vadd.f32 %v481, %v551
  %553 = vmatmul.f32.gmra.mxu0 %v490
  %v554 = vpop.f32.mrf.mxu0
  %v555 = vadd.f32 %v481, %v554
  %556 = vmatmul.f32.gmra.mxu0 %v493
  %v557 = vpop.f32.mrf.mxu0
  %v558 = vadd.f32 %v481, %v557
  %559 = vmatmul.f32.gmra.mxu0 %v496
  %v560 = vpop.f32.mrf.mxu0
  %v561 = vadd.f32 %v481, %v560
  %562 = vmatmul.f32.gmra.mxu0 %v499
  %v563 = vpop.f32.mrf.mxu0
  %v564 = vadd.f32 %v481, %v563
  %565 = vmatmul.f32.gmra.mxu0 %v502
  %v566 = vpop.f32.mrf.mxu0
  %v567 = vadd.f32 %v481, %v566
  %568 = vmatmul.f32.gmra.mxu0 %v505
  %v569 = vpop.f32.mrf.mxu0
  %v570 = vadd.f32 %v481, %v569
  %571 = vmatmul.f32.gmra.mxu0 %v508
  %v572 = vpop.f32.mrf.mxu0
  %v573 = vadd.f32 %v481, %v572
  %574 = vmatmul.f32.gmra.mxu0 %v511
  %v575 = vpop.f32.mrf.mxu0
  %v576 = vadd.f32 %v481, %v575
  %577 = vmatmul.f32.gmra.mxu0 %v514
  %v578 = vpop.f32.mrf.mxu0
  %v579 = vadd.f32 %v481, %v578
  %580 = vmatmul.f32.gmra.mxu0 %v517
  %v581 = vpop.f32.mrf.mxu0
  %v582 = vadd.f32 %v481, %v581
  %583 = vmatmul.f32.gmra.mxu0 %v520
  %v584 = vpop.f32.mrf.mxu0
  %v585 = vadd.f32 %v481, %v584
  %586 = vmatmul.f32.gmra.mxu0 %v523
  %v587 = vpop.f32.mrf.mxu0
  %v588 = vadd.f32 %v481, %v587
  %589 = vmatmul.f32.gmra.mxu0 %v526
  %v590 = vpop.f32.mrf.mxu0
  %v591 = vadd.f32 %v481, %v590
  %592 = vmatmul.f32.gmra.mxu0 %v529
  %v593 = vpop.f32.mrf.mxu0
  %v594 = vadd.f32 %v481, %v593
  %595 = vdwg.mxu0
  %vm596 = vcmask 23552
  %597 = vst.msk [vmem:[%s9] sm:$0xff] %vm596, %v549
  %598 = vst.msk [vmem:[%s9 + $0x8] sm:$0xff] %vm596, %v552
  %599 = vst.msk [vmem:[%s9 + $0x10] sm:$0xff] %vm596, %v555
  %600 = vst.msk [vmem:[%s9 + $0x18] sm:$0xff] %vm596, %v558
  %601 = vst.msk [vmem:[%s9 + $0x20] sm:$0xff] %vm596, %v561
  %602 = vst.msk [vmem:[%s9 + $0x28] sm:$0xff] %vm596, %v564
  %603 = vst.msk [vmem:[%s9 + $0x30] sm:$0xff] %vm596, %v567
  %604 = vst.msk [vmem:[%s9 + $0x38] sm:$0xff] %vm596, %v570
  %605 = vst.msk [vmem:[%s9 + $0x40] sm:$0xff] %vm596, %v573
  %606 = vst.msk [vmem:[%s9 + $0x48] sm:$0xff] %vm596, %v576
  %607 = vst.msk [vmem:[%s9 + $0x50] sm:$0xff] %vm596, %v579
  %608 = vst.msk [vmem:[%s9 + $0x58] sm:$0xff] %vm596, %v582
  %609 = vst.msk [vmem:[%s9 + $0x60] sm:$0xff] %vm596, %v585
  %610 = vst.msk [vmem:[%s9 + $0x68] sm:$0xff] %vm596, %v588
  %611 = vst.msk [vmem:[%s9 + $0x70] sm:$0xff] %vm596, %v591
  %612 = vst.msk [vmem:[%s9 + $0x78] sm:$0xff] %vm596, %v594
  // Predicated region
  $region38: #{winenet_forward.1} parent=0 // pred_check
    _
  $region39: #{winenet_forward.1} parent=0 // pred_check_branch
    %614 = sbr.rel (0) target = $region41
  $region40: #{winenet_forward.1} parent=0 // pred_region
    _
  $region41: #{winenet_forward.1} parent=0 // pred_fallthru
    _
  // Predicated region
  $region42: #{winenet_forward.1} parent=0 // pred_check
    _
  $region43: #{winenet_forward.1} parent=0 // pred_check_branch
    %616 = sbr.rel (0) target = $region45
  $region44: #{winenet_forward.1} parent=0 // pred_region
    _
  $region45: #{winenet_forward.1} parent=0 // pred_fallthru
    _

</llo_original>
